<compile_context>
chip_gen: v5e
topology: v5e:2x2
jax: 0.10.0
libtpu: 0.0.40
codegen_flags: <defaults>
</compile_context>

<pallas_src>
import jax
import jax.numpy as jnp
from jax.experimental import pallas as pl
from jax.experimental.pallas import tpu as pltpu
import numpy as np


def _make_pad_kernel_2d(pad_width, data_width):
    """Channel zero-pad on a flattened (nb, C*S) -> (nb, (C+2p)*S) slab."""

    def kernel(x_ref, o_ref):
        nb = o_ref.shape[0]
        zeros = jnp.zeros((nb, pad_width), o_ref.dtype)
        o_ref[:, :pad_width] = zeros                                # left pad
        o_ref[:, pad_width:pad_width + data_width] = x_ref[...]     # data
        o_ref[:, pad_width + data_width:] = zeros                   # right pad

    return kernel


def _make_pad_kernel_3d(pad, c_in):
    """Fallback: pad along the channel (sublane) axis of a (nb, C, S) block."""

    def kernel(x_ref, o_ref):
        nb, _, s = o_ref.shape
        zeros = jnp.zeros((nb, pad, s), o_ref.dtype)
        o_ref[:, :pad, :] = zeros
        o_ref[:, pad:pad + c_in, :] = x_ref[...]
        o_ref[:, pad + c_in:, :] = zeros

    return kernel


def _round_up(x, m):
    return ((x + m - 1) // m) * m


def _target_block_bytes():
    """Per-step output block size target, by HBM bandwidth class."""
    try:
        kind = jax.devices()[0].device_kind.lower()
    except Exception:
        return 4 << 20
    if "v7" in kind:
        return 8 << 20      # ~3.2 TB/s: big blocks to amortize 0.35 us/step
    if "v6" in kind:
        return 4 << 20      # ~1.4 TB/s
    return 2 << 20          # v5e / older: overhead already <10% at 2 MiB


def _pick_batch_block(n, in_row_bytes, out_row_bytes, itemsize,
                      target_bytes, vmem_budget_bytes=32 << 20):
    """Images per grid step: ~target_bytes of output, capped by VMEM budget.

    nb is the sublane (second-to-last) block dim, so round it to the dtype's
    packed sublane multiple.  No exact-divisor requirement: the caller uses
    grid = pl.cdiv(N, nb) and Pallas handles the ragged final block.
    """
    sub = max(8, 8 * (4 // max(itemsize, 1)))   # 8 f32, 16 bf16, 32 int8/fp8
    nb = max(1, target_bytes // max(out_row_bytes, 1))
    # Hard cap: double-buffered input + output blocks must fit the budget.
    per_img = 2 * (in_row_bytes + out_row_bytes)
    nb = min(nb, max(1, vmem_budget_bytes // max(per_img, 1)))
    # Keep >= 2 grid steps when possible so both v7x TensorCores get work.
    if n >= 2 * sub:
        nb = min(nb, _round_up(-(-n // 2), sub))
    nb = min(nb, n)
    if nb < sub:
        nb = min(sub, n)            # full batch, or one sublane-aligned block
    else:
        nb = (nb // sub) * sub
    return max(nb, 1)


def lambda_layer(x, planes):
    """Pallas TPU implementation of the ResNet32 option-A shortcut lambda."""
    N, C, H, W = x.shape
    pad = planes // 4
    C_out = C + 2 * pad
    H_out = (H + 1) // 2
    W_out = (W + 1) // 2
    S = H_out * W_out

    # Stride-2 spatial downsample as an XLA strided slice in the wrapper;
    # allow_input_fusion below lets XLA fuse it into the pallas_call operand
    # so the downsampled intermediate need not round-trip through HBM.
    x_ds = x[:, :, ::2, ::2]

    if pad == 0:
        return x_ds

    itemsize = jnp.dtype(x.dtype).itemsize
    data_width = C * S
    pad_width = pad * S
    out_width = C_out * S
    in_row_bytes = data_width * itemsize
    out_row_bytes = out_width * itemsize

    nb = _pick_batch_block(N, in_row_bytes, out_row_bytes, itemsize,
                           _target_block_bytes())
    grid = (pl.cdiv(N, nb),)

    vmem_limit = int(min(60 << 20,
                         max(16 << 20,
                             2 * nb * (in_row_bytes + out_row_bytes)
                             + (2 << 20))))

    cost = pl.CostEstimate(
        flops=0, transcendentals=0,
        bytes_accessed=N * (data_width + out_width) * itemsize)

    cparams = pltpu.CompilerParams(
        dimension_semantics=("parallel",),
        allow_input_fusion=[True],
        vmem_limit_bytes=vmem_limit)

    # Lane-dense 2-D path needs the slab boundaries 128-lane aligned so the
    # data / right-pad stores are unmasked full-vreg vst (true for ResNet32).
    lane_aligned = (pad_width % 128 == 0) and (data_width % 128 == 0)

    if lane_aligned:
        out_flat = pl.pallas_call(
            _make_pad_kernel_2d(pad_width, data_width),
            out_shape=jax.ShapeDtypeStruct((N, out_width), x.dtype),
            grid_spec=pltpu.PrefetchScalarGridSpec(
                num_scalar_prefetch=0,
                grid=grid,
                in_specs=[pl.BlockSpec((nb, data_width), lambda n: (n, 0))],
                out_specs=pl.BlockSpec((nb, out_width), lambda n: (n, 0)),
            ),
            compiler_params=cparams,
            cost_estimate=cost,
        )(x_ds.reshape(N, data_width))
        return out_flat.reshape(N, C_out, H_out, W_out)

    # Fallback: 3-D blocks; pad slabs sliced on the channel (sublane) axis.
    out3 = pl.pallas_call(
        _make_pad_kernel_3d(pad, C),
        out_shape=jax.ShapeDtypeStruct((N, C_out, S), x.dtype),
        grid_spec=pltpu.PrefetchScalarGridSpec(
            num_scalar_prefetch=0,
            grid=grid,
            in_specs=[pl.BlockSpec((nb, C, S), lambda n: (n, 0, 0))],
            out_specs=pl.BlockSpec((nb, C_out, S), lambda n: (n, 0, 0)),
        ),
        compiler_params=cparams,
        cost_estimate=cost,
    )(x_ds.reshape(N, C, S))
    return out3.reshape(N, C_out, H_out, W_out)


def lambda_layer_ref(x, planes):
    """Pure-JAX reference matching the PyTorch lambda exactly."""
    pad = planes // 4
    ds = x[:, :, ::2, ::2]
    return jnp.pad(ds, ((0, 0), (pad, pad), (0, 0), (0, 0)),
                   mode="constant", constant_values=0)


if __name__ == "__main__":
    # Small shapes: batch=2, in_channels=4, spatial=16x16, shortcut to planes=8
    key = jax.random.PRNGKey(0)
    x = jax.random.normal(key, (2, 4, 16, 16), dtype=jnp.float32)
    planes = 8  # LambdaLayer is parameter-free; planes comes from the closure

    out = lambda_layer(x, planes)
    out = jax.block_until_ready(out)

    ref = lambda_layer_ref(x, planes)
    np.testing.assert_allclose(np.asarray(out), np.asarray(ref),
                               rtol=0.0, atol=0.0)

    print("KERNEL_OK")
</pallas_src>

<mosaic_0001>
module attributes {stable_mosaic.version = 11 : i64} {
  func.func @kernel(%arg0: i32, %arg1: memref<2x256xf32, #tpu.memory_space<vmem>>, %arg2: memref<2x512xf32, #tpu.memory_space<vmem>>) attributes {dimension_semantics = [#tpu.dimension_semantics<parallel>], iteration_bounds = array<i64: 1>, scalar_prefetch = 0 : i64, scratch_operands = 0 : i64, tpu.core_type = #tpu.core_type<tc>, window_params = [{transform_indices = @transform_0, window_bounds = array<i64: 2, 256>}, {transform_indices = @transform_1, window_bounds = array<i64: 2, 512>}]} {
    %cst = arith.constant 0.000000e+00 : f32
    %0 = vector.broadcast %cst : f32 to vector<2x128xf32>
    %c0 = arith.constant 0 : index
    %c0_0 = arith.constant 0 : index
    %1 = vector.load %arg2[%c0, %c0_0] : memref<2x512xf32, #tpu.memory_space<vmem>>, vector<2x128xf32>
    tpu.vector_store %arg2[%c0, %c0_0], %0 {strides = array<i32>} : memref<2x512xf32, #tpu.memory_space<vmem>>, vector<2x128xf32>,
    %c0_1 = arith.constant 0 : index
    %c0_2 = arith.constant 0 : index
    %2 = vector.load %arg1[%c0_1, %c0_2] : memref<2x256xf32, #tpu.memory_space<vmem>>, vector<2x256xf32>
    %c0_3 = arith.constant 0 : index
    %c128 = arith.constant 128 : index
    %3 = vector.load %arg2[%c0_3, %c128] : memref<2x512xf32, #tpu.memory_space<vmem>>, vector<2x256xf32>
    tpu.vector_store %arg2[%c0_3, %c128], %2 {strides = array<i32>} : memref<2x512xf32, #tpu.memory_space<vmem>>, vector<2x256xf32>,
    %c0_4 = arith.constant 0 : index
    %c384 = arith.constant 384 : index
    %4 = vector.load %arg2[%c0_4, %c384] : memref<2x512xf32, #tpu.memory_space<vmem>>, vector<2x128xf32>
    tpu.vector_store %arg2[%c0_4, %c384], %0 {strides = array<i32>} : memref<2x512xf32, #tpu.memory_space<vmem>>, vector<2x128xf32>,
    return
  }
  func.func @transform_0(%arg0: i32) -> (i32, i32) {
    %c0_i32 = arith.constant 0 : i32
    %c0_i32_0 = arith.constant 0 : i32
    return %arg0, %c0_i32 : i32, i32
  }
  func.func @transform_1(%arg0: i32) -> (i32, i32) {
    %c0_i32 = arith.constant 0 : i32
    %c0_i32_0 = arith.constant 0 : i32
    return %arg0, %c0_i32 : i32, i32
  }
}

</mosaic_0001>

<llo_original>
// kernel: tpu_custom_call.1
$region0: #{tpu_custom_call.1}
  #allocation0 [shape = 'u32[]', space=smem, size = 0x4, offset = 0x4, fixed_abs, tag = 'smem constant byte address 0x4 - core index']
  #allocation1 [shape = 'u32[72,128]{1,0:T(1,128)}', space=vmem, size = 0x9000, scoped, tag = 'internal scratch']
  %s0 = inlined_call_operand.hbm [shape: f32[2,256], index: 0, kind: input, shape index: {}]
  %s1 = inlined_call_operand.hbm [shape: f32[2,512], index: 1, kind: output, shape index: {}]
  %s2 = sld [smem:[#allocation0]]
  $region18: #{tpu_custom_call.1} parent=0
    _
  %s4 = ssub.s32 1, %s2
  %s5 = scalar_select 0, %s4, %s2
  $region1: #{tpu_custom_call.1} parent=0
    #allocation2 [shape = 'u8[2048]{0}', space=vmem, size = 0x800, scoped, tag = 'input window, operand 0, single buffered']
    #allocation3 [shape = 's32[1]{0}', space=sflag, size = 0x4, scoped, tag = 'scoped memory for tpu_custom_call.1']
    #allocation4 [shape = 's32[1]{0}', space=sflag, size = 0x4, scoped, tag = 'scoped memory for tpu_custom_call.1']
    #allocation5 [shape = 'u8[4096]{0}', space=vmem, size = 0x1000, scoped, tag = 'output window, operand 0, single buffered']
    %6 = vsyncpa [#allocation3], 0
    %7 = vsyncpa [#allocation4], 0
    // Predicated region
    $region2: #{tpu_custom_call.1} parent=1 // pred_check
      _
    $region3: #{tpu_custom_call.1} parent=1 // pred_check_branch
      %9 = sbr.rel (0) target = $region5
    $region4: #{tpu_custom_call.1} parent=1 // pred_region
      %11 = vsyncadd [#allocation3], 0
      %s13 = sshll.u32 %s0, 4
      %s14 = int_to_ptr.hbm [resolvable:$true] %s13
      %s15 = sshll.u32 [#allocation2], 4
      %s16 = int_to_ptr.vmem [resolvable:$true] %s15
      %18 = dma.hbm_to_vmem [thread:$0]  %s14, 64, %s16, [#allocation3]
    $region5: #{tpu_custom_call.1} parent=1 // pred_fallthru
      _
    // Predicated region
    $region6: #{tpu_custom_call.1} parent=1 // pred_check
      _
    $region7: #{tpu_custom_call.1} parent=1 // pred_check_branch
      %20 = sbr.rel (0) target = $region9
    $region8: #{tpu_custom_call.1} parent=1 // pred_region
      %22 = dma.done [#allocation3], 64
    $region9: #{tpu_custom_call.1} parent=1 // pred_fallthru
      _
    %23 = vst [vmem:[#allocation5] sm:$0x3] 0.0
    %v24 = vld [vmem:[#allocation2] sm:$0xf]
    %25 = vst [vmem:[#allocation5 + $0x2] sm:$0xf] %v24
    %26 = vst [vmem:[#allocation5 + $0x6] sm:$0x3] 0.0
    // Predicated region
    $region10: #{tpu_custom_call.1} parent=1 // pred_check
      _
    $region11: #{tpu_custom_call.1} parent=1 // pred_check_branch
      %28 = sbr.rel (0) target = $region13
    $region12: #{tpu_custom_call.1} parent=1 // pred_region
      %30 = vsyncadd [#allocation4], 0
      %s32 = sshll.u32 [#allocation5], 4
      %s33 = int_to_ptr.vmem [resolvable:$true] %s32
      %s34 = sshll.u32 %s1, 4
      %s35 = int_to_ptr.hbm [resolvable:$true] %s34
      %37 = dma.vmem_to_hbm [thread:$0]  %s33, 128, %s35, [#allocation4]
    $region13: #{tpu_custom_call.1} parent=1 // pred_fallthru
      _
    // Predicated region
    $region14: #{tpu_custom_call.1} parent=1 // pred_check
      _
    $region15: #{tpu_custom_call.1} parent=1 // pred_check_branch
      %39 = sbr.rel (0) target = $region17
    $region16: #{tpu_custom_call.1} parent=1 // pred_region
      %41 = dma.done [#allocation4], 128
    $region17: #{tpu_custom_call.1} parent=1 // pred_fallthru
      _
    %42 = vsyncpa [#allocation3], 1
    %43 = vsyncpa [#allocation4], 1

</llo_original>
